<compile_context>
chip_gen: v6e
topology: v6e:2x2x1
jax: 0.10.0
libtpu: 0.0.40
codegen_flags: <defaults>
</compile_context>

<pallas_src>
import math
import functools

import jax
import jax.numpy as jnp
from jax.experimental import pallas as pl
from jax.experimental.pallas import tpu as pltpu


NEG_SLOPE = 0.2
DROP_P = 0.3


def _round_up(x, m):
    return (x + m - 1) // m * m


# -----------------------------------------------------------------------------
# Kernel
# -----------------------------------------------------------------------------
def _generator_kernel(*refs, dims_p, row_off, use_mask):
    """Fused 4-layer MLP on one (TILE_B, D) batch tile.

    refs (eval):  x_ref, wp_ref, bp_ref, o_ref
    refs (train): x_ref, mask_ref, wp_ref, bp_ref, o_ref
    """
    if use_mask:
        x_ref, m_ref, wp_ref, bp_ref, o_ref = refs
    else:
        x_ref, wp_ref, bp_ref, o_ref = refs
        m_ref = None

    h = x_ref[...]  # bf16 (TILE_B, dims_p[0])
    for i in range(4):
        k_p = dims_p[i]
        n_p = dims_p[i + 1]
        r = row_off[i]
        w = wp_ref[r:r + k_p, 0:n_p]        # bf16, tile-aligned static slice
        b = bp_ref[i:i + 1, 0:n_p]          # f32 (1, n_p)
        y = jnp.dot(h, w, preferred_element_type=jnp.float32) + b
        if i < 3:
            y = jnp.where(y > 0, y, NEG_SLOPE * y)     # leaky_relu in f32 (VPU)
            if i == 2 and use_mask:
                y = y * m_ref[...]                     # pre-scaled keep mask
            h = y.astype(jnp.bfloat16)                 # bf16 only for the MXU
        else:
            o_ref[...] = jnp.tanh(y)                   # f32 output, lane-dense


# -----------------------------------------------------------------------------
# Parameter init / packing
# -----------------------------------------------------------------------------
def init_generator_params(key, input_size, hidden_size, output_size):
    """Mimics torch.nn.Linear default init; weights stored as [in, out]."""
    dims = [input_size, hidden_size, hidden_size * 2, hidden_size * 4, output_size]
    params = {}
    for i in range(4):
        fan_in, fan_out = dims[i], dims[i + 1]
        key, kw, kb = jax.random.split(key, 3)
        bound = 1.0 / math.sqrt(fan_in)
        params[f"w{i+1}"] = jax.random.uniform(
            kw, (fan_in, fan_out), jnp.float32, -bound, bound)
        params[f"b{i+1}"] = jax.random.uniform(
            kb, (1, fan_out), jnp.float32, -bound, bound)
    return params


def pack_generator_params(params):
    """Pack the 8 weight/bias arrays into one bf16 W buffer + one f32 b buffer."""
    dims = (params["w1"].shape[0], params["w1"].shape[1],
            params["w2"].shape[1], params["w3"].shape[1], params["w4"].shape[1])
    dims_p = tuple(_round_up(d, 128) for d in dims)

    row_off, off = [], 0
    for i in range(4):
        row_off.append(off)
        off += dims_p[i]
    n_max = max(dims_p[1:])

    wp = jnp.zeros((off, n_max), jnp.bfloat16)
    bp = jnp.zeros((8, n_max), jnp.float32)
    for i in range(4):
        w = params[f"w{i+1}"].astype(jnp.bfloat16)
        b = params[f"b{i+1}"].astype(jnp.float32).reshape(-1)
        wp = wp.at[row_off[i]:row_off[i] + dims[i], :dims[i + 1]].set(w)
        bp = bp.at[i, :dims[i + 1]].set(b)

    meta = (dims, dims_p, tuple(row_off))
    return wp, bp, meta


# -----------------------------------------------------------------------------
# Forward wrapper
# -----------------------------------------------------------------------------
@functools.partial(jax.jit, static_argnames=("meta", "training", "tile_b"))
def generator_forward(x, wp, bp, meta, training=False, rng=None, tile_b=256):
    dims, dims_p, row_off = meta
    B, d_in = x.shape
    assert d_in == dims[0]

    tb = min(tile_b, _round_up(B, 8))
    b_pad = _round_up(B, tb)
    grid = (b_pad // tb,)

    # Pad x to (B_pad, dims_p[0]) and cast to bf16 (halves x DMA, MXU-native).
    x_p = jnp.zeros((b_pad, dims_p[0]), jnp.bfloat16)
    x_p = x_p.at[:B, :d_in].set(x.astype(jnp.bfloat16))

    in_arrays = [x_p]
    in_specs = [pl.BlockSpec((tb, dims_p[0]), lambda i: (i, 0))]

    if training:
        # TODO(synk): RNG stream differs from torch.nn.Dropout (semantics match,
        # exact bit pattern does not).  Inverted dropout, pre-scaled keep mask.
        keep = jax.random.bernoulli(rng, 1.0 - DROP_P, (b_pad, dims_p[3]))
        mask = keep.astype(jnp.float32) * (1.0 / (1.0 - DROP_P))
        in_arrays.append(mask)
        in_specs.append(pl.BlockSpec((tb, dims_p[3]), lambda i: (i, 0)))

    # Packed weights/biases: constant index_map -> resident in VMEM across grid.
    in_arrays += [wp, bp]
    in_specs += [pl.BlockSpec(wp.shape, lambda i: (0, 0)),
                 pl.BlockSpec(bp.shape, lambda i: (0, 0))]

    kernel = functools.partial(_generator_kernel,
                               dims_p=dims_p, row_off=row_off, use_mask=training)

    out_p = pl.pallas_call(
        kernel,
        out_shape=jax.ShapeDtypeStruct((b_pad, dims_p[4]), jnp.float32),
        grid=grid,
        in_specs=in_specs,
        out_specs=pl.BlockSpec((tb, dims_p[4]), lambda i: (i, 0)),
        compiler_params=pltpu.CompilerParams(
            dimension_semantics=("parallel",)),
    )(*in_arrays)

    return out_p[:B, :dims[4]]


# -----------------------------------------------------------------------------
# Pure-JAX reference (same bf16-operand / f32-accumulate math, eval mode)
# -----------------------------------------------------------------------------
def _reference_forward(x, params):
    def mm(a, w):
        return jnp.dot(a.astype(jnp.bfloat16), w.astype(jnp.bfloat16),
                       preferred_element_type=jnp.float32)
    h = mm(x, params["w1"]) + params["b1"]
    h = jnp.where(h > 0, h, NEG_SLOPE * h)
    h = mm(h, params["w2"]) + params["b2"]
    h = jnp.where(h > 0, h, NEG_SLOPE * h)
    h = mm(h, params["w3"]) + params["b3"]
    h = jnp.where(h > 0, h, NEG_SLOPE * h)
    return jnp.tanh(mm(h, params["w4"]) + params["b4"])


if __name__ == "__main__":
    # Small shapes consistent with the Generator MLP:
    # noise dim = 16, hidden = 32  ->  layers 16 -> 32 -> 64 -> 128 -> 64
    batch = 100
    input_size = 16
    hidden_size = 32
    output_size = 64

    key = jax.random.PRNGKey(0)
    key_x, key_p, key_d = jax.random.split(key, 3)
    x = jax.random.normal(key_x, (batch, input_size), dtype=jnp.float32)
    params = init_generator_params(key_p, input_size, hidden_size, output_size)
    wp, bp, meta = pack_generator_params(params)

    # Eval-mode forward (dropout = identity); tile_b=32 -> grid of 4 batch tiles
    # with zero-padded tail rows, exercising the batch grid + resident weights.
    out = generator_forward(x, wp, bp, meta=meta, training=False, tile_b=32)
    out = jax.block_until_ready(out)
    ref = _reference_forward(x, params)
    assert out.shape == (batch, output_size)
    assert jnp.allclose(out, ref, atol=1e-3, rtol=1e-3), \
        float(jnp.max(jnp.abs(out - ref)))

    # Training-mode forward (inverted dropout via host-side mask).
    out_train = generator_forward(x, wp, bp, meta=meta, training=True,
                                  rng=key_d, tile_b=32)
    out_train = jax.block_until_ready(out_train)
    assert out_train.shape == (batch, output_size)
    assert bool(jnp.all(jnp.isfinite(out_train)))

    print("KERNEL_OK")
</pallas_src>

<mosaic_0001>
module attributes {stable_mosaic.version = 11 : i64} {
  func.func @_generator_kernel(%arg0: i32, %arg1: memref<32x128xbf16, #tpu.memory_space<vmem>>, %arg2: memref<512x128xbf16, #tpu.memory_space<vmem>>, %arg3: memref<8x128xf32, #tpu.memory_space<vmem>>, %arg4: memref<32x128xf32, #tpu.memory_space<vmem>>) attributes {dimension_semantics = [#tpu.dimension_semantics<parallel>], iteration_bounds = array<i64: 4>, scalar_prefetch = 0 : i64, scratch_operands = 0 : i64, tpu.core_type = #tpu.core_type<tc>, window_params = [{transform_indices = @transform_0, window_bounds = array<i64: 32, 128>}, {pipeline_mode = #tpu.pipeline_mode<synchronous>, transform_indices = @transform_1, window_bounds = array<i64: 512, 128>}, {pipeline_mode = #tpu.pipeline_mode<synchronous>, transform_indices = @transform_2, window_bounds = array<i64: 8, 128>}, {transform_indices = @transform_3, window_bounds = array<i64: 32, 128>}]} {
    %c0 = arith.constant 0 : index
    %c0_0 = arith.constant 0 : index
    %0 = vector.load %arg1[%c0, %c0_0] : memref<32x128xbf16, #tpu.memory_space<vmem>>, vector<32x128xbf16>
    %c0_1 = arith.constant 0 : index
    %c0_2 = arith.constant 0 : index
    %1 = vector.load %arg2[%c0_1, %c0_2] : memref<512x128xbf16, #tpu.memory_space<vmem>>, vector<128x128xbf16>
    %c0_3 = arith.constant 0 : index
    %c0_4 = arith.constant 0 : index
    %2 = vector.load %arg3[%c0_3, %c0_4] : memref<8x128xf32, #tpu.memory_space<vmem>>, vector<1x128xf32>
    %cst = arith.constant dense<0.000000e+00> : vector<32x128xf32>
    %3 = tpu.matmul %0, %1, %cst {dimension_numbers = #tpu.dot_dimension_numbers<[1], [0], [0], [1], [0, 0, 1, 1], [], []>} : vector<32x128xbf16>, vector<128x128xbf16>, vector<32x128xf32> -> vector<32x128xf32>
    %4 = vector.broadcast %2 : vector<1x128xf32> to vector<32x128xf32>
    %5 = arith.addf %3, %4 : vector<32x128xf32>
    %cst_5 = arith.constant 0.000000e+00 : f32
    %6 = vector.broadcast %cst_5 : f32 to vector<32x128xf32>
    %7 = arith.cmpf ogt, %5, %6 : vector<32x128xf32>
    %cst_6 = arith.constant 2.000000e-01 : f32
    %8 = vector.broadcast %cst_6 : f32 to vector<32x128xf32>
    %9 = arith.mulf %8, %5 : vector<32x128xf32>
    %10 = arith.select %7, %5, %9 : vector<32x128xi1>, vector<32x128xf32>
    %11 = arith.truncf %10 : vector<32x128xf32> to vector<32x128xbf16>
    %c128 = arith.constant 128 : index
    %c0_7 = arith.constant 0 : index
    %12 = vector.load %arg2[%c128, %c0_7] : memref<512x128xbf16, #tpu.memory_space<vmem>>, vector<128x128xbf16>
    %c1 = arith.constant 1 : index
    %c0_8 = arith.constant 0 : index
    %13 = vector.load %arg3[%c1, %c0_8] : memref<8x128xf32, #tpu.memory_space<vmem>>, vector<1x128xf32>
    %cst_9 = arith.constant dense<0.000000e+00> : vector<32x128xf32>
    %14 = tpu.matmul %11, %12, %cst_9 {dimension_numbers = #tpu.dot_dimension_numbers<[1], [0], [0], [1], [0, 0, 1, 1], [], []>} : vector<32x128xbf16>, vector<128x128xbf16>, vector<32x128xf32> -> vector<32x128xf32>
    %15 = vector.broadcast %13 : vector<1x128xf32> to vector<32x128xf32>
    %16 = arith.addf %14, %15 : vector<32x128xf32>
    %cst_10 = arith.constant 0.000000e+00 : f32
    %17 = vector.broadcast %cst_10 : f32 to vector<32x128xf32>
    %18 = arith.cmpf ogt, %16, %17 : vector<32x128xf32>
    %cst_11 = arith.constant 2.000000e-01 : f32
    %19 = vector.broadcast %cst_11 : f32 to vector<32x128xf32>
    %20 = arith.mulf %19, %16 : vector<32x128xf32>
    %21 = arith.select %18, %16, %20 : vector<32x128xi1>, vector<32x128xf32>
    %22 = arith.truncf %21 : vector<32x128xf32> to vector<32x128xbf16>
    %c256 = arith.constant 256 : index
    %c0_12 = arith.constant 0 : index
    %23 = vector.load %arg2[%c256, %c0_12] : memref<512x128xbf16, #tpu.memory_space<vmem>>, vector<128x128xbf16>
    %c2 = arith.constant 2 : index
    %c0_13 = arith.constant 0 : index
    %24 = vector.load %arg3[%c2, %c0_13] : memref<8x128xf32, #tpu.memory_space<vmem>>, vector<1x128xf32>
    %cst_14 = arith.constant dense<0.000000e+00> : vector<32x128xf32>
    %25 = tpu.matmul %22, %23, %cst_14 {dimension_numbers = #tpu.dot_dimension_numbers<[1], [0], [0], [1], [0, 0, 1, 1], [], []>} : vector<32x128xbf16>, vector<128x128xbf16>, vector<32x128xf32> -> vector<32x128xf32>
    %26 = vector.broadcast %24 : vector<1x128xf32> to vector<32x128xf32>
    %27 = arith.addf %25, %26 : vector<32x128xf32>
    %cst_15 = arith.constant 0.000000e+00 : f32
    %28 = vector.broadcast %cst_15 : f32 to vector<32x128xf32>
    %29 = arith.cmpf ogt, %27, %28 : vector<32x128xf32>
    %cst_16 = arith.constant 2.000000e-01 : f32
    %30 = vector.broadcast %cst_16 : f32 to vector<32x128xf32>
    %31 = arith.mulf %30, %27 : vector<32x128xf32>
    %32 = arith.select %29, %27, %31 : vector<32x128xi1>, vector<32x128xf32>
    %33 = arith.truncf %32 : vector<32x128xf32> to vector<32x128xbf16>
    %c384 = arith.constant 384 : index
    %c0_17 = arith.constant 0 : index
    %34 = vector.load %arg2[%c384, %c0_17] : memref<512x128xbf16, #tpu.memory_space<vmem>>, vector<128x128xbf16>
    %c3 = arith.constant 3 : index
    %c0_18 = arith.constant 0 : index
    %35 = vector.load %arg3[%c3, %c0_18] : memref<8x128xf32, #tpu.memory_space<vmem>>, vector<1x128xf32>
    %cst_19 = arith.constant dense<0.000000e+00> : vector<32x128xf32>
    %36 = tpu.matmul %33, %34, %cst_19 {dimension_numbers = #tpu.dot_dimension_numbers<[1], [0], [0], [1], [0, 0, 1, 1], [], []>} : vector<32x128xbf16>, vector<128x128xbf16>, vector<32x128xf32> -> vector<32x128xf32>
    %37 = vector.broadcast %35 : vector<1x128xf32> to vector<32x128xf32>
    %38 = arith.addf %36, %37 : vector<32x128xf32>
    %39 = math.tanh %38 : vector<32x128xf32>
    %c0_20 = arith.constant 0 : index
    %c0_21 = arith.constant 0 : index
    %40 = vector.load %arg4[%c0_20, %c0_21] : memref<32x128xf32, #tpu.memory_space<vmem>>, vector<32x128xf32>
    tpu.vector_store %arg4[%c0_20, %c0_21], %39 {strides = array<i32>} : memref<32x128xf32, #tpu.memory_space<vmem>>, vector<32x128xf32>,
    return
  }
  func.func @transform_0(%arg0: i32) -> (i32, i32) {
    %c0_i32 = arith.constant 0 : i32
    %c0_i32_0 = arith.constant 0 : i32
    return %arg0, %c0_i32 : i32, i32
  }
  func.func @transform_1(%arg0: i32) -> (i32, i32) {
    %c0_i32 = arith.constant 0 : i32
    %c0_i32_0 = arith.constant 0 : i32
    %c0_i32_1 = arith.constant 0 : i32
    return %c0_i32, %c0_i32_0 : i32, i32
  }
  func.func @transform_2(%arg0: i32) -> (i32, i32) {
    %c0_i32 = arith.constant 0 : i32
    %c0_i32_0 = arith.constant 0 : i32
    %c0_i32_1 = arith.constant 0 : i32
    return %c0_i32, %c0_i32_0 : i32, i32
  }
  func.func @transform_3(%arg0: i32) -> (i32, i32) {
    %c0_i32 = arith.constant 0 : i32
    %c0_i32_0 = arith.constant 0 : i32
    return %arg0, %c0_i32 : i32, i32
  }
}

</mosaic_0001>

<llo_original>
// kernel: generator_forward.1
$region0: #{generator_forward.1}
  #allocation0 [shape = 'u32[]', space=smem, size = 0x4, offset = 0x4, fixed_abs, tag = 'smem constant byte address 0x4 - core index']
  #allocation1 [shape = 'u32[144,128]{1,0:T(1,128)}', space=vmem, size = 0x12000, scoped, tag = 'internal scratch']
  %s0 = inlined_call_operand.vmem [shape: bf16[128,128], index: 0, kind: input, shape index: {}]
  %s1 = inlined_call_operand.hbm [shape: bf16[512,128], index: 1, kind: input, shape index: {}]
  %s2 = inlined_call_operand.vmem [shape: f32[8,128], index: 2, kind: input, shape index: {}]
  %s3 = inlined_call_operand.vmem [shape: f32[128,128], index: 3, kind: output, shape index: {}]
  %s4 = sld [smem:[#allocation0]]
  $region49: #{generator_forward.1} parent=0
    _
  %s6 = ssub.s32 1, %s4
  %s7 = scalar_select 0, %s6, %s4
  $region1: #{generator_forward.1} parent=0
    #allocation2 [shape = 'u8[131072]{0}', space=vmem, size = 0x20000, scoped, tag = 'input window, operand 1, single buffered']
    #allocation3 [shape = 's32[2]{0}', space=sflag, size = 0x8, scoped, tag = 'scoped memory for generator_forward.1']
    %8 = vsyncpa [#allocation3], 0
    loop: start=0, step=1, limit=6
    $region2: #{generator_forward.1} parent=1 // loop_pre_header
      _
    $region3: #{generator_forward.1} parent=1 // loop_header
      %s10 = sphi 0, %s14
      %p11 = scmp.ge.s32.totalorder %s10, 6
      %s20 = sphi 0, %s22
      %s23 = sphi 0, %s20
      %s24 = sphi 0, %s23
      %s40 = sphi 0, %s24
      %s44 = sphi 0, %s44
      %s46 = sphi 0, %s44
      %s47 = sphi 0, %s46
      %s61 = sphi 0, %s47
      %s65 = sphi 0, %s65
      %s67 = sphi 0, %s65
      %s68 = sphi 0, %s67
      %s82 = sphi 0, %s68
      %s88 = sphi 0, %s90
      %s91 = sphi 0, %s88
      %s92 = sphi 0, %s91
      %s108 = sphi 0, %s92
    $region4: #{generator_forward.1} parent=1 // loop_header_branch
      %13 = sbr.rel (%p11) target = $region8
    $region5: #{generator_forward.1} parent=1 // loop_body
      %s15 = ssub.s32 %s10, 1
      %s16 = ssub.s32 %s10, 2
      %s17 = sadd.s32 %s10, 1
      %s18 = ssub.s32 %s10, %s17
      %p19 = scmp.eq.s32.totalorder %s18, 0
      %s21 = sadd.s32 %s20, 1
      %s22 = scalar_select %p19, %s20, %s21
      %p25 = pneg %p19
      %p26 = scmp.eq.s32.totalorder %s10, 3
      %p27 = por %p25, %p26
      %p28 = scmp.ne.s32.totalorder %s20, %s23
      %p29 = scmp.eq.s32.totalorder %s10, 0
      %p30 = por %p28, %p29
      %p31 = scmp.ne.s32.totalorder %s20, %s23
      %p32 = scmp.eq.s32.totalorder %s15, 3
      %p33 = por %p31, %p32
      %p34 = scmp.ne.s32.totalorder %s23, %s24
      %p35 = scmp.eq.s32.totalorder %s15, 0
      %p36 = por %p34, %p35
      %p37 = scmp.ne.s32.totalorder %s23, %s24
      %p38 = scmp.eq.s32.totalorder %s16, 3
      %p39 = por %p37, %p38
      %p41 = scmp.ne.s32.totalorder %s24, %s40
      %p42 = scmp.eq.s32.totalorder %s16, 0
      %p43 = por %p41, %p42
      %s45 = sadd.s32 %s44, 1
      %p48 = scmp.eq.s32.totalorder %s10, 3
      %p49 = scmp.ne.s32.totalorder %s44, %s46
      %p50 = scmp.eq.s32.totalorder %s10, 0
      %p51 = por %p49, %p50
      %p52 = scmp.ne.s32.totalorder %s44, %s46
      %p53 = scmp.eq.s32.totalorder %s15, 3
      %p54 = por %p52, %p53
      %p55 = scmp.ne.s32.totalorder %s46, %s47
      %p56 = scmp.eq.s32.totalorder %s15, 0
      %p57 = por %p55, %p56
      %p58 = scmp.ne.s32.totalorder %s46, %s47
      %p59 = scmp.eq.s32.totalorder %s16, 3
      %p60 = por %p58, %p59
      %p62 = scmp.ne.s32.totalorder %s47, %s61
      %p63 = scmp.eq.s32.totalorder %s16, 0
      %p64 = por %p62, %p63
      %s66 = sadd.s32 %s65, 1
      %p69 = scmp.eq.s32.totalorder %s10, 3
      %p70 = scmp.ne.s32.totalorder %s65, %s67
      %p71 = scmp.eq.s32.totalorder %s10, 0
      %p72 = por %p70, %p71
      %p73 = scmp.ne.s32.totalorder %s65, %s67
      %p74 = scmp.eq.s32.totalorder %s15, 3
      %p75 = por %p73, %p74
      %p76 = scmp.ne.s32.totalorder %s67, %s68
      %p77 = scmp.eq.s32.totalorder %s15, 0
      %p78 = por %p76, %p77
      %p79 = scmp.ne.s32.totalorder %s67, %s68
      %p80 = scmp.eq.s32.totalorder %s16, 3
      %p81 = por %p79, %p80
      %p83 = scmp.ne.s32.totalorder %s68, %s82
      %p84 = scmp.eq.s32.totalorder %s16, 0
      %p85 = por %p83, %p84
      %s86 = ssub.s32 %s10, %s17
      %p87 = scmp.eq.s32.totalorder %s86, 0
      %s89 = sadd.s32 %s88, 1
      %s90 = scalar_select %p87, %s88, %s89
      %p93 = pneg %p87
      %p94 = scmp.eq.s32.totalorder %s10, 3
      %p95 = por %p93, %p94
      %p96 = scmp.ne.s32.totalorder %s88, %s91
      %p97 = scmp.eq.s32.totalorder %s10, 0
      %p98 = por %p96, %p97
      %p99 = scmp.ne.s32.totalorder %s88, %s91
      %p100 = scmp.eq.s32.totalorder %s15, 3
      %p101 = por %p99, %p100
      %p102 = scmp.ne.s32.totalorder %s91, %s92
      %p103 = scmp.eq.s32.totalorder %s15, 0
      %p104 = por %p102, %p103
      %p105 = scmp.ne.s32.totalorder %s91, %s92
      %p106 = scmp.eq.s32.totalorder %s16, 3
      %p107 = por %p105, %p106
      %p109 = scmp.ne.s32.totalorder %s92, %s108
      %p110 = scmp.eq.s32.totalorder %s16, 0
      %p111 = por %p109, %p110
      %p112 = scmp.le.s32.totalorder 1, %s10
      %p113 = scmp.lt.s32.totalorder %s10, 5
      %p114 = pnand %p112, %p113
      %p115 = pneg %p114
      // Predicated region
      $region9: #{generator_forward.1} parent=5 // pred_check
        _
      $region10: #{generator_forward.1} parent=5 // pred_check_branch
        %117 = sbr.rel (%p114) target = $region12
      $region11: #{generator_forward.1} parent=5 // pred_region
        %s118 = ssub.s32 %s10, 1
        // Predicated region
        $region13: #{generator_forward.1} parent=11 // pred_check
          %p119 = pneg %p57
        $region14: #{generator_forward.1} parent=11 // pred_check_branch
          %121 = sbr.rel (%p119) target = $region16
        $region15: #{generator_forward.1} parent=11 // pred_region
          %s123 = ssub.s32 4096, 4096
          %124 = vsyncadd [#allocation3], %s123
          %s125 = sshll.u32 [#allocation2], 4
          %s126 = int_to_ptr.vmem [resolvable:$true] %s125
          %131 = dma.hbm_to_vmem [thread:$0]  %s1, 4096, %s126, [#allocation3], 64, 64, 4
        $region16: #{generator_forward.1} parent=11 // pred_fallthru
          _
        // Predicated region
        $region17: #{generator_forward.1} parent=11 // pred_check
          %p132 = pneg %p78
        $region18: #{generator_forward.1} parent=11 // pred_check_branch
          %134 = sbr.rel (%p132) target = $region20
        $region19: #{generator_forward.1} parent=11 // pred_region
          _
        $region20: #{generator_forward.1} parent=11 // pred_fallthru
          _
      $region12: #{generator_forward.1} parent=5 // pred_fallthru
        _
      %p135 = scmp.lt.s32.totalorder %s10, 4
      // Predicated region
      $region21: #{generator_forward.1} parent=5 // pred_check
        %p136 = pneg %p135
      $region22: #{generator_forward.1} parent=5 // pred_check_branch
        %138 = sbr.rel (%p136) target = $region24
      $region23: #{generator_forward.1} parent=5 // pred_region
        // Predicated region
        $region25: #{generator_forward.1} parent=23 // pred_check
          %p139 = pneg %p30
        $region26: #{generator_forward.1} parent=23 // pred_check_branch
          %141 = sbr.rel (%p139) target = $region28
        $region27: #{generator_forward.1} parent=23 // pred_region
          %s142 = smul.u32 4, %s10
          %p143 = scmp.lt.s32.totalorder %s142, 15
          %s144 = scalar_select %p143, %s142, 15
          %s145 = smul.addr %s144, 4
          %s146 = scalar_lea.vmem %s0, %s145
          %s147 = smul.u32 4, %s10
        $region28: #{generator_forward.1} parent=23 // pred_fallthru
          _
      $region24: #{generator_forward.1} parent=5 // pred_fallthru
        _
      %p148 = scmp.le.s32.totalorder 1, %s10
      %p149 = scmp.lt.s32.totalorder %s10, 5
      %p150 = pnand %p148, %p149
      %p151 = pneg %p150
      // Predicated region
      $region29: #{generator_forward.1} parent=5 // pred_check
        _
      $region30: #{generator_forward.1} parent=5 // pred_check_branch
        %153 = sbr.rel (%p150) target = $region32
      $region31: #{generator_forward.1} parent=5 // pred_region
        %s154 = ssub.s32 %s10, 1
        // Predicated region
        $region33: #{generator_forward.1} parent=31 // pred_check
          %p155 = pneg %p57
        $region34: #{generator_forward.1} parent=31 // pred_check_branch
          %157 = sbr.rel (%p155) target = $region36
        $region35: #{generator_forward.1} parent=31 // pred_region
          %158 = dma.done [#allocation3], 4096
        $region36: #{generator_forward.1} parent=31 // pred_fallthru
          _
        %s159 = smul.u32 4, %s15
        %p160 = scmp.lt.s32.totalorder %s159, 15
        %s161 = scalar_select %p160, %s159, 15
        %s162 = smul.addr %s161, 4
        %s163 = scalar_lea.vmem %s0, %s162
        %p164 = pneg %p36
        %p165 = pneg %p33
        %p166 = pneg %p57
        %p167 = pneg %p54
        %p168 = pneg %p78
        %p169 = pneg %p75
        %p170 = pneg %p104
        %p171 = pneg %p101
        %s172 = smul.u32 4, %s15
        %p173 = scmp.lt.s32.totalorder %s172, 15
        %s174 = scalar_select %p173, %s172, 15
        %s175 = smul.addr %s174, 8
        %s176 = scalar_lea.vmem %s3, %s175
        %s177 = smul.u32 4, %s15
        %p178 = scmp.lt.s32.totalorder %s177, 15
        %s179 = scalar_select %p178, %s177, 15
        %s180 = smul.addr %s179, 4
        %s181 = scalar_lea.vmem %s0, %s180
        %s182 = smul.u32 4, %s15
        %s183 = smul.u32 4, %s15
        %p184 = scmp.lt.s32.totalorder %s183, 15
        %s185 = scalar_select %p184, %s183, 15
        %s186 = smul.addr %s185, 8
        %s187 = scalar_lea.vmem %s3, %s186
        %s188 = smul.u32 4, %s15
        %v190 = vld [vmem:[%s181] sm:$0xf]
        %v191 = vld [vmem:[%s181 + $0x4] sm:$0xf]
        %v192 = vld [vmem:[%s181 + $0x8] sm:$0xf]
        %v193 = vld [vmem:[%s181 + $0xc] sm:$0xf]
        %v194 = vld [vmem:[#allocation2] sm:$0xf]
        %v195 = vld [vmem:[#allocation2 + $0x4] sm:$0xf]
        %v196 = vld [vmem:[#allocation2 + $0x8] sm:$0xf]
        %v197 = vld [vmem:[#allocation2 + $0xc] sm:$0xf]
        %v198 = vld [vmem:[#allocation2 + $0x10] sm:$0xf]
        %v199 = vld [vmem:[#allocation2 + $0x14] sm:$0xf]
        %v200 = vld [vmem:[#allocation2 + $0x18] sm:$0xf]
        %v201 = vld [vmem:[#allocation2 + $0x1c] sm:$0xf]
        %v202 = vld [vmem:[#allocation2 + $0x20] sm:$0xf]
        %v203 = vld [vmem:[#allocation2 + $0x24] sm:$0xf]
        %v204 = vld [vmem:[#allocation2 + $0x28] sm:$0xf]
        %v205 = vld [vmem:[#allocation2 + $0x2c] sm:$0xf]
        %v206 = vld [vmem:[#allocation2 + $0x30] sm:$0xf]
        %v207 = vld [vmem:[#allocation2 + $0x34] sm:$0xf]
        %v208 = vld [vmem:[#allocation2 + $0x38] sm:$0xf]
        %v209 = vld [vmem:[#allocation2 + $0x3c] sm:$0xf]
        %v210 = vld [vmem:[%s2] sm:$0x1]
        %v211 = vlaneseq
        %v212 = vshrl.u32 %v211, 7
        %v213 = vsub.s32 0, %v212
        %v214 = vrot.slane %v210, %v213
        %v219 = vunpack.c.l.b16 %v190
        %v220 = vunpack.c.l.b16 %v191
        %v221 = vunpack.c.l.b16 %v192
        %v222 = vunpack.c.l.b16 %v193
        %v223 = vpack.c.b16 %v220, %v219
        %v224 = vpack.c.b16 %v222, %v221
        %v243 = vunpack.c.l.b16 %v194
        %v244 = vunpack.c.l.b16 %v195
        %v245 = vunpack.c.l.b16 %v196
        %v246 = vunpack.c.l.b16 %v197
        %v247 = vunpack.c.l.b16 %v198
        %v248 = vunpack.c.l.b16 %v199
        %v249 = vunpack.c.l.b16 %v200
        %v250 = vunpack.c.l.b16 %v201
        %v251 = vunpack.c.l.b16 %v202
        %v252 = vunpack.c.l.b16 %v203
        %v253 = vunpack.c.l.b16 %v204
        %v254 = vunpack.c.l.b16 %v205
        %v255 = vunpack.c.l.b16 %v206
        %v256 = vunpack.c.l.b16 %v207
        %v257 = vunpack.c.l.b16 %v208
        %v258 = vunpack.c.l.b16 %v209
        %v259 = vpack.c.b16 %v244, %v243
        %v260 = vpack.c.b16 %v246, %v245
        %v261 = vpack.c.b16 %v248, %v247
        %v262 = vpack.c.b16 %v250, %v249
        %v263 = vpack.c.b16 %v252, %v251
        %v264 = vpack.c.b16 %v254, %v253
        %v265 = vpack.c.b16 %v256, %v255
        %v266 = vpack.c.b16 %v258, %v257
        %275 = vmatprep.subr.bf16.mxu0 0
        %276 = vmatpush1.bf16.msra.mxu0 %v266
        %277 = vmatprep.subr.bf16.mxu0 0
        %278 = vmatpush1.bf16.msra.mxu0 %v265
        %279 = vmatprep.subr.bf16.mxu0 0
        %280 = vmatpush1.bf16.msra.mxu0 %v264
        %281 = vmatprep.subr.bf16.mxu0 0
        %282 = vmatpush1.bf16.msra.mxu0 %v263
        %283 = vmatprep.subr.bf16.mxu0 0
        %284 = vmatpush1.bf16.msra.mxu0 %v262
        %285 = vmatprep.subr.bf16.mxu0 0
        %286 = vmatpush1.bf16.msra.mxu0 %v261
        %287 = vmatprep.subr.bf16.mxu0 0
        %288 = vmatpush1.bf16.msra.mxu0 %v260
        %289 = vmatprep.subr.bf16.mxu0 0
        %290 = vmatpush1.bf16.msra.mxu0 %v259
        %291 = vmatprep.subr.bf16.mxu0 0
        %292 = vmatpush2.bf16.msra.mxu0 0
        %293 = vmatprep.subr.bf16.mxu0 0
        %294 = vmatpush2.bf16.msra.mxu0 0
        %295 = vmatprep.subr.bf16.mxu0 0
        %296 = vmatpush2.bf16.msra.mxu0 0
        %297 = vmatprep.subr.bf16.mxu0 0
        %298 = vmatpush2.bf16.msra.mxu0 0
        %299 = vmatprep.subr.bf16.mxu0 0
        %300 = vmatpush2.bf16.msra.mxu0 0
        %301 = vmatprep.subr.bf16.mxu0 0
        %302 = vmatpush2.bf16.msra.mxu0 0
        %303 = vmatprep.subr.bf16.mxu0 0
        %304 = vmatpush2.bf16.msra.mxu0 0
        %305 = vmatprep.subr.bf16.mxu0 0
        %306 = vmatpush2.bf16.msra.mxu0 0
        %307 = vmatprep.mubr.bf16.mxu0 0
        %308 = vmatmul.mubr.bf16.gmra.mxu0 %v223
        %v309 = vpop.f32.mrf.mxu0
        %v310 = vadd.f32 %v214, %v309
        %v311 = vpop.f32.mrf.mxu0
        %v312 = vpop.f32.mrf.mxu0
        %v313 = vadd.f32 %v214, %v312
        %v314 = vpop.f32.mrf.mxu0
        %315 = vmatprep.mubr.bf16.mxu0 0
        %316 = vmatmul.mubr.bf16.gmra.mxu0 %v224
        %v317 = vpop.f32.mrf.mxu0
        %v318 = vadd.f32 %v214, %v317
        %v319 = vpop.f32.mrf.mxu0
        %v320 = vpop.f32.mrf.mxu0
        %v321 = vadd.f32 %v214, %v320
        %v322 = vpop.f32.mrf.mxu0
        %323 = vdwg.mxu0
        %vm324 = vcmp.gt.f32.partialorder %v310, 0.0
        %vm325 = vcmp.gt.f32.partialorder %v313, 0.0
        %vm326 = vcmp.gt.f32.partialorder %v318, 0.0
        %vm327 = vcmp.gt.f32.partialorder %v321, 0.0
        %v328 = vmul.f32 %v310, 0.2
        %v329 = vmul.f32 %v313, 0.2
        %v330 = vmul.f32 %v318, 0.2
        %v331 = vmul.f32 %v321, 0.2
        %v332 = vsel %vm324, %v310, %v328
        %v333 = vsel %vm325, %v313, %v329
        %v334 = vsel %vm326, %v318, %v330
        %v335 = vsel %vm327, %v321, %v331
        %v336 = vpack.c.bf16 %v333, %v332
        %v337 = vpack.c.bf16 %v335, %v334
        %v338 = vld [vmem:[#allocation2 + $0x40] sm:$0xf]
        %v339 = vld [vmem:[#allocation2 + $0x44] sm:$0xf]
        %v340 = vld [vmem:[#allocation2 + $0x48] sm:$0xf]
        %v341 = vld [vmem:[#allocation2 + $0x4c] sm:$0xf]
        %v342 = vld [vmem:[#allocation2 + $0x50] sm:$0xf]
        %v343 = vld [vmem:[#allocation2 + $0x54] sm:$0xf]
        %v344 = vld [vmem:[#allocation2 + $0x58] sm:$0xf]
        %v345 = vld [vmem:[#allocation2 + $0x5c] sm:$0xf]
        %v346 = vld [vmem:[#allocation2 + $0x60] sm:$0xf]
        %v347 = vld [vmem:[#allocation2 + $0x64] sm:$0xf]
        %v348 = vld [vmem:[#allocation2 + $0x68] sm:$0xf]
        %v349 = vld [vmem:[#allocation2 + $0x6c] sm:$0xf]
        %v350 = vld [vmem:[#allocation2 + $0x70] sm:$0xf]
        %v351 = vld [vmem:[#allocation2 + $0x74] sm:$0xf]
        %v352 = vld [vmem:[#allocation2 + $0x78] sm:$0xf]
        %v353 = vld [vmem:[#allocation2 + $0x7c] sm:$0xf]
        %v354 = vld [vmem:[%s2 + $0x1] sm:$0x1]
        %v355 = vlaneseq
        %v356 = vshrl.u32 %v355, 7
        %v357 = vsub.s32 0, %v356
        %v358 = vrot.slane %v354, %v357
        %v375 = vunpack.c.l.b16 %v338
        %v376 = vunpack.c.l.b16 %v339
        %v377 = vunpack.c.l.b16 %v340
        %v378 = vunpack.c.l.b16 %v341
        %v379 = vunpack.c.l.b16 %v342
        %v380 = vunpack.c.l.b16 %v343
        %v381 = vunpack.c.l.b16 %v344
        %v382 = vunpack.c.l.b16 %v345
        %v383 = vunpack.c.l.b16 %v346
        %v384 = vunpack.c.l.b16 %v347
        %v385 = vunpack.c.l.b16 %v348
        %v386 = vunpack.c.l.b16 %v349
        %v387 = vunpack.c.l.b16 %v350
        %v388 = vunpack.c.l.b16 %v351
        %v389 = vunpack.c.l.b16 %v352
        %v390 = vunpack.c.l.b16 %v353
        %v391 = vpack.c.b16 %v376, %v375
        %v392 = vpack.c.b16 %v378, %v377
        %v393 = vpack.c.b16 %v380, %v379
        %v394 = vpack.c.b16 %v382, %v381
        %v395 = vpack.c.b16 %v384, %v383
        %v396 = vpack.c.b16 %v386, %v385
        %v397 = vpack.c.b16 %v388, %v387
        %v398 = vpack.c.b16 %v390, %v389
        %407 = vmatprep.subr.bf16.mxu0 0
        %408 = vmatpush1.bf16.msra.mxu0 %v398
        %409 = vmatprep.subr.bf16.mxu0 0
        %410 = vmatpush1.bf16.msra.mxu0 %v397
        %411 = vmatprep.subr.bf16.mxu0 0
        %412 = vmatpush1.bf16.msra.mxu0 %v396
        %413 = vmatprep.subr.bf16.mxu0 0
        %414 = vmatpush1.bf16.msra.mxu0 %v395
        %415 = vmatprep.subr.bf16.mxu0 0
        %416 = vmatpush1.bf16.msra.mxu0 %v394
        %417 = vmatprep.subr.bf16.mxu0 0
        %418 = vmatpush1.bf16.msra.mxu0 %v393
        %419 = vmatprep.subr.bf16.mxu0 0
        %420 = vmatpush1.bf16.msra.mxu0 %v392
        %421 = vmatprep.subr.bf16.mxu0 0
        %422 = vmatpush1.bf16.msra.mxu0 %v391
        %423 = vmatprep.subr.bf16.mxu0 0
        %424 = vmatpush2.bf16.msra.mxu0 0
        %425 = vmatprep.subr.bf16.mxu0 0
        %426 = vmatpush2.bf16.msra.mxu0 0
        %427 = vmatprep.subr.bf16.mxu0 0
        %428 = vmatpush2.bf16.msra.mxu0 0
        %429 = vmatprep.subr.bf16.mxu0 0
        %430 = vmatpush2.bf16.msra.mxu0 0
        %431 = vmatprep.subr.bf16.mxu0 0
        %432 = vmatpush2.bf16.msra.mxu0 0
        %433 = vmatprep.subr.bf16.mxu0 0
        %434 = vmatpush2.bf16.msra.mxu0 0
        %435 = vmatprep.subr.bf16.mxu0 0
        %436 = vmatpush2.bf16.msra.mxu0 0
        %437 = vmatprep.subr.bf16.mxu0 0
        %438 = vmatpush2.bf16.msra.mxu0 0
        %439 = vmatprep.mubr.bf16.mxu0 0
        %440 = vmatmul.mubr.bf16.gmra.mxu0 %v336
        %v441 = vpop.f32.mrf.mxu0
        %v442 = vadd.f32 %v358, %v441
        %v443 = vpop.f32.mrf.mxu0
        %v444 = vpop.f32.mrf.mxu0
        %v445 = vadd.f32 %v358, %v444
        %v446 = vpop.f32.mrf.mxu0
        %447 = vmatprep.mubr.bf16.mxu0 0
        %448 = vmatmul.mubr.bf16.gmra.mxu0 %v337
        %v449 = vpop.f32.mrf.mxu0
        %v450 = vadd.f32 %v358, %v449
        %v451 = vpop.f32.mrf.mxu0
        %v452 = vpop.f32.mrf.mxu0
        %v453 = vadd.f32 %v358, %v452
        %v454 = vpop.f32.mrf.mxu0
        %455 = vdwg.mxu0
        %vm456 = vcmp.gt.f32.partialorder %v442, 0.0
        %vm457 = vcmp.gt.f32.partialorder %v445, 0.0
        %vm458 = vcmp.gt.f32.partialorder %v450, 0.0
        %vm459 = vcmp.gt.f32.partialorder %v453, 0.0
        %v460 = vmul.f32 %v442, 0.2
        %v461 = vmul.f32 %v445, 0.2
        %v462 = vmul.f32 %v450, 0.2
        %v463 = vmul.f32 %v453, 0.2
        %v464 = vsel %vm456, %v442, %v460
        %v465 = vsel %vm457, %v445, %v461
        %v466 = vsel %vm458, %v450, %v462
        %v467 = vsel %vm459, %v453, %v463
        %v468 = vpack.c.bf16 %v465, %v464
        %v469 = vpack.c.bf16 %v467, %v466
        %v470 = vld [vmem:[#allocation2 + $0x80] sm:$0xf]
        %v471 = vld [vmem:[#allocation2 + $0x84] sm:$0xf]
        %v472 = vld [vmem:[#allocation2 + $0x88] sm:$0xf]
        %v473 = vld [vmem:[#allocation2 + $0x8c] sm:$0xf]
        %v474 = vld [vmem:[#allocation2 + $0x90] sm:$0xf]
        %v475 = vld [vmem:[#allocation2 + $0x94] sm:$0xf]
        %v476 = vld [vmem:[#allocation2 + $0x98] sm:$0xf]
        %v477 = vld [vmem:[#allocation2 + $0x9c] sm:$0xf]
        %v478 = vld [vmem:[#allocation2 + $0xa0] sm:$0xf]
        %v479 = vld [vmem:[#allocation2 + $0xa4] sm:$0xf]
        %v480 = vld [vmem:[#allocation2 + $0xa8] sm:$0xf]
        %v481 = vld [vmem:[#allocation2 + $0xac] sm:$0xf]
        %v482 = vld [vmem:[#allocation2 + $0xb0] sm:$0xf]
        %v483 = vld [vmem:[#allocation2 + $0xb4] sm:$0xf]
        %v484 = vld [vmem:[#allocation2 + $0xb8] sm:$0xf]
        %v485 = vld [vmem:[#allocation2 + $0xbc] sm:$0xf]
        %v486 = vld [vmem:[%s2 + $0x2] sm:$0x1]
        %v487 = vlaneseq
        %v488 = vshrl.u32 %v487, 7
        %v489 = vsub.s32 0, %v488
        %v490 = vrot.slane %v486, %v489
        %v507 = vunpack.c.l.b16 %v470
        %v508 = vunpack.c.l.b16 %v471
        %v509 = vunpack.c.l.b16 %v472
        %v510 = vunpack.c.l.b16 %v473
        %v511 = vunpack.c.l.b16 %v474
        %v512 = vunpack.c.l.b16 %v475
        %v513 = vunpack.c.l.b16 %v476
        %v514 = vunpack.c.l.b16 %v477
        %v515 = vunpack.c.l.b16 %v478
        %v516 = vunpack.c.l.b16 %v479
        %v517 = vunpack.c.l.b16 %v480
        %v518 = vunpack.c.l.b16 %v481
        %v519 = vunpack.c.l.b16 %v482
        %v520 = vunpack.c.l.b16 %v483
        %v521 = vunpack.c.l.b16 %v484
        %v522 = vunpack.c.l.b16 %v485
        %v523 = vpack.c.b16 %v508, %v507
        %v524 = vpack.c.b16 %v510, %v509
        %v525 = vpack.c.b16 %v512, %v511
        %v526 = vpack.c.b16 %v514, %v513
        %v527 = vpack.c.b16 %v516, %v515
        %v528 = vpack.c.b16 %v518, %v517
        %v529 = vpack.c.b16 %v520, %v519
        %v530 = vpack.c.b16 %v522, %v521
        %539 = vmatprep.subr.bf16.mxu0 0
        %540 = vmatpush1.bf16.msra.mxu0 %v530
        %541 = vmatprep.subr.bf16.mxu0 0
        %542 = vmatpush1.bf16.msra.mxu0 %v529
        %543 = vmatprep.subr.bf16.mxu0 0
        %544 = vmatpush1.bf16.msra.mxu0 %v528
        %545 = vmatprep.subr.bf16.mxu0 0
        %546 = vmatpush1.bf16.msra.mxu0 %v527
        %547 = vmatprep.subr.bf16.mxu0 0
        %548 = vmatpush1.bf16.msra.mxu0 %v526
        %549 = vmatprep.subr.bf16.mxu0 0
        %550 = vmatpush1.bf16.msra.mxu0 %v525
        %551 = vmatprep.subr.bf16.mxu0 0
        %552 = vmatpush1.bf16.msra.mxu0 %v524
        %553 = vmatprep.subr.bf16.mxu0 0
        %554 = vmatpush1.bf16.msra.mxu0 %v523
        %555 = vmatprep.subr.bf16.mxu0 0
        %556 = vmatpush2.bf16.msra.mxu0 0
        %557 = vmatprep.subr.bf16.mxu0 0
        %558 = vmatpush2.bf16.msra.mxu0 0
        %559 = vmatprep.subr.bf16.mxu0 0
        %560 = vmatpush2.bf16.msra.mxu0 0
        %561 = vmatprep.subr.bf16.mxu0 0
        %562 = vmatpush2.bf16.msra.mxu0 0
        %563 = vmatprep.subr.bf16.mxu0 0
        %564 = vmatpush2.bf16.msra.mxu0 0
        %565 = vmatprep.subr.bf16.mxu0 0
        %566 = vmatpush2.bf16.msra.mxu0 0
        %567 = vmatprep.subr.bf16.mxu0 0
        %568 = vmatpush2.bf16.msra.mxu0 0
        %569 = vmatprep.subr.bf16.mxu0 0
        %570 = vmatpush2.bf16.msra.mxu0 0
        %571 = vmatprep.mubr.bf16.mxu0 0
        %572 = vmatmul.mubr.bf16.gmra.mxu0 %v468
        %v573 = vpop.f32.mrf.mxu0
        %v574 = vadd.f32 %v490, %v573
        %v575 = vpop.f32.mrf.mxu0
        %v576 = vpop.f32.mrf.mxu0
        %v577 = vadd.f32 %v490, %v576
        %v578 = vpop.f32.mrf.mxu0
        %579 = vmatprep.mubr.bf16.mxu0 0
        %580 = vmatmul.mubr.bf16.gmra.mxu0 %v469
        %v581 = vpop.f32.mrf.mxu0
        %v582 = vadd.f32 %v490, %v581
        %v583 = vpop.f32.mrf.mxu0
        %v584 = vpop.f32.mrf.mxu0
        %v585 = vadd.f32 %v490, %v584
        %v586 = vpop.f32.mrf.mxu0
        %587 = vdwg.mxu0
        %vm588 = vcmp.gt.f32.partialorder %v574, 0.0
        %vm589 = vcmp.gt.f32.partialorder %v577, 0.0
        %vm590 = vcmp.gt.f32.partialorder %v582, 0.0
        %vm591 = vcmp.gt.f32.partialorder %v585, 0.0
        %v592 = vmul.f32 %v574, 0.2
        %v593 = vmul.f32 %v577, 0.2
        %v594 = vmul.f32 %v582, 0.2
        %v595 = vmul.f32 %v585, 0.2
        %v596 = vsel %vm588, %v574, %v592
        %v597 = vsel %vm589, %v577, %v593
        %v598 = vsel %vm590, %v582, %v594
        %v599 = vsel %vm591, %v585, %v595
        %v600 = vpack.c.bf16 %v597, %v596
        %v601 = vpack.c.bf16 %v599, %v598
        %v602 = vld [vmem:[#allocation2 + $0xc0] sm:$0xf]
        %v603 = vld [vmem:[#allocation2 + $0xc4] sm:$0xf]
        %v604 = vld [vmem:[#allocation2 + $0xc8] sm:$0xf]
        %v605 = vld [vmem:[#allocation2 + $0xcc] sm:$0xf]
        %v606 = vld [vmem:[#allocation2 + $0xd0] sm:$0xf]
        %v607 = vld [vmem:[#allocation2 + $0xd4] sm:$0xf]
        %v608 = vld [vmem:[#allocation2 + $0xd8] sm:$0xf]
        %v609 = vld [vmem:[#allocation2 + $0xdc] sm:$0xf]
        %v610 = vld [vmem:[#allocation2 + $0xe0] sm:$0xf]
        %v611 = vld [vmem:[#allocation2 + $0xe4] sm:$0xf]
        %v612 = vld [vmem:[#allocation2 + $0xe8] sm:$0xf]
        %v613 = vld [vmem:[#allocation2 + $0xec] sm:$0xf]
        %v614 = vld [vmem:[#allocation2 + $0xf0] sm:$0xf]
        %v615 = vld [vmem:[#allocation2 + $0xf4] sm:$0xf]
        %v616 = vld [vmem:[#allocation2 + $0xf8] sm:$0xf]
        %v617 = vld [vmem:[#allocation2 + $0xfc] sm:$0xf]
        %v618 = vld [vmem:[%s2 + $0x3] sm:$0x1]
        %v619 = vlaneseq
        %v620 = vshrl.u32 %v619, 7
        %v621 = vsub.s32 0, %v620
        %v622 = vrot.slane %v618, %v621
        %v639 = vunpack.c.l.b16 %v602
        %v640 = vunpack.c.l.b16 %v603
        %v641 = vunpack.c.l.b16 %v604
        %v642 = vunpack.c.l.b16 %v605
        %v643 = vunpack.c.l.b16 %v606
        %v644 = vunpack.c.l.b16 %v607
        %v645 = vunpack.c.l.b16 %v608
        %v646 = vunpack.c.l.b16 %v609
        %v647 = vunpack.c.l.b16 %v610
        %v648 = vunpack.c.l.b16 %v611
        %v649 = vunpack.c.l.b16 %v612
        %v650 = vunpack.c.l.b16 %v613
        %v651 = vunpack.c.l.b16 %v614
        %v652 = vunpack.c.l.b16 %v615
        %v653 = vunpack.c.l.b16 %v616
        %v654 = vunpack.c.l.b16 %v617
        %v655 = vpack.c.b16 %v640, %v639
        %v656 = vpack.c.b16 %v642, %v641
        %v657 = vpack.c.b16 %v644, %v643
        %v658 = vpack.c.b16 %v646, %v645
        %v659 = vpack.c.b16 %v648, %v647
        %v660 = vpack.c.b16 %v650, %v649
        %v661 = vpack.c.b16 %v652, %v651
        %v662 = vpack.c.b16 %v654, %v653
        %671 = vmatprep.subr.bf16.mxu0 0
        %672 = vmatpush1.bf16.msra.mxu0 %v662
        %673 = vmatprep.subr.bf16.mxu0 0
        %674 = vmatpush1.bf16.msra.mxu0 %v661
        %675 = vmatprep.subr.bf16.mxu0 0
        %676 = vmatpush1.bf16.msra.mxu0 %v660
        %677 = vmatprep.subr.bf16.mxu0 0
        %678 = vmatpush1.bf16.msra.mxu0 %v659
        %679 = vmatprep.subr.bf16.mxu0 0
        %680 = vmatpush1.bf16.msra.mxu0 %v658
        %681 = vmatprep.subr.bf16.mxu0 0
        %682 = vmatpush1.bf16.msra.mxu0 %v657
        %683 = vmatprep.subr.bf16.mxu0 0
        %684 = vmatpush1.bf16.msra.mxu0 %v656
        %685 = vmatprep.subr.bf16.mxu0 0
        %686 = vmatpush1.bf16.msra.mxu0 %v655
        %687 = vmatprep.subr.bf16.mxu0 0
        %688 = vmatpush2.bf16.msra.mxu0 0
        %689 = vmatprep.subr.bf16.mxu0 0
        %690 = vmatpush2.bf16.msra.mxu0 0
        %691 = vmatprep.subr.bf16.mxu0 0
        %692 = vmatpush2.bf16.msra.mxu0 0
        %693 = vmatprep.subr.bf16.mxu0 0
        %694 = vmatpush2.bf16.msra.mxu0 0
        %695 = vmatprep.subr.bf16.mxu0 0
        %696 = vmatpush2.bf16.msra.mxu0 0
        %697 = vmatprep.subr.bf16.mxu0 0
        %698 = vmatpush2.bf16.msra.mxu0 0
        %699 = vmatprep.subr.bf16.mxu0 0
        %700 = vmatpush2.bf16.msra.mxu0 0
        %701 = vmatprep.subr.bf16.mxu0 0
        %702 = vmatpush2.bf16.msra.mxu0 0
        %703 = vmatprep.mubr.bf16.mxu0 0
        %704 = vmatmul.mubr.bf16.gmra.mxu0 %v600
        %v705 = vpop.f32.mrf.mxu0
        %v706 = vadd.f32 %v622, %v705
        %v707 = vpop.f32.mrf.mxu0
        %v708 = vpop.f32.mrf.mxu0
        %v709 = vadd.f32 %v622, %v708
        %v710 = vpop.f32.mrf.mxu0
        %711 = vmatprep.mubr.bf16.mxu0 0
        %712 = vmatmul.mubr.bf16.gmra.mxu0 %v601
        %v713 = vpop.f32.mrf.mxu0
        %v714 = vadd.f32 %v622, %v713
        %v715 = vpop.f32.mrf.mxu0
        %v716 = vpop.f32.mrf.mxu0
        %v717 = vadd.f32 %v622, %v716
        %v718 = vpop.f32.mrf.mxu0
        %719 = vdwg.mxu0
        %v720 = vtanh.pop %v706
        %v721 = vtanh.pop %v709
        %v722 = vtanh.pop %v714
        %v723 = vtanh.pop %v717
        %724 = vst [vmem:[%s187] sm:$0xff] %v720
        %725 = vst [vmem:[%s187 + $0x8] sm:$0xff] %v721
        %726 = vst [vmem:[%s187 + $0x10] sm:$0xff] %v722
        %727 = vst [vmem:[%s187 + $0x18] sm:$0xff] %v723
        %s728 = smul.u32 4, %s15
        %p729 = scmp.lt.s32.totalorder %s728, 15
        %s730 = scalar_select %p729, %s728, 15
        %s731 = smul.addr %s730, 8
        %s732 = scalar_lea.vmem %s3, %s731
        // Predicated region
        $region37: #{generator_forward.1} parent=31 // pred_check
          %p733 = pneg %p101
        $region38: #{generator_forward.1} parent=31 // pred_check_branch
          %735 = sbr.rel (%p733) target = $region40
        $region39: #{generator_forward.1} parent=31 // pred_region
          %s736 = smul.u32 4, %s15
        $region40: #{generator_forward.1} parent=31 // pred_fallthru
          _
      $region32: #{generator_forward.1} parent=5 // pred_fallthru
        _
      %p737 = scmp.le.s32.totalorder 2, %s10
      // Predicated region
      $region41: #{generator_forward.1} parent=5 // pred_check
        %p738 = pneg %p737
      $region42: #{generator_forward.1} parent=5 // pred_check_branch
        %740 = sbr.rel (%p738) target = $region44
      $region43: #{generator_forward.1} parent=5 // pred_region
        %s741 = ssub.s32 %s10, 2
        // Predicated region
        $region45: #{generator_forward.1} parent=43 // pred_check
          %p742 = pneg %p107
        $region46: #{generator_forward.1} parent=43 // pred_check_branch
          %744 = sbr.rel (%p742) target = $region48
        $region47: #{generator_forward.1} parent=43 // pred_region
          %s745 = smul.u32 4, %s16
          %p746 = scmp.lt.s32.totalorder %s745, 15
          %s747 = scalar_select %p746, %s745, 15
          %s748 = smul.addr %s747, 8
          %s749 = scalar_lea.vmem %s3, %s748
        $region48: #{generator_forward.1} parent=43 // pred_fallthru
          _
      $region44: #{generator_forward.1} parent=5 // pred_fallthru
        _
    $region6: #{generator_forward.1} parent=1 // loop_footer
      %s14 = sadd.s32 1, %s10
    $region7: #{generator_forward.1} parent=1 // loop_footer_branch
      %9 = sbr.rel target = $region3
    $region8: #{generator_forward.1} parent=1 // loop_exit
      _
    %750 = vsyncpa [#allocation3], 1
    %s751 = scalar_lea.sflag [#allocation3], 1
    %752 = vsyncpa %s751, 1

</llo_original>
